<compile_context>
chip_gen: v7x
topology: tpu7x:2x2x1
jax: 0.10.0
libtpu: 0.0.40
codegen_flags: <defaults>
</compile_context>

<pallas_src>
import jax
import jax.numpy as jnp
from jax import lax
from jax.experimental import pallas as pl
from jax.experimental.pallas import tpu as pltpu


def _make_lstm_fc_kernel(B, T, I, H, O, rows):
    """Builds the fused LSTM+FC kernel with all sizes / offsets baked in."""
    ROW_WIH, ROW_WHH, ROW_B, ROW_WFC, ROW_BFC = rows
    G = 4 * H

    def kernel(x_ref, p_ref, out_ref):
        # ---- unpack the single packed parameter slab (8-row aligned slices) ----
        w_ih = p_ref[ROW_WIH:ROW_WIH + I, 0:G]        # (I, 4H)  gate order i,f,o,g
        w_hh = p_ref[ROW_WHH:ROW_WHH + H, 0:G]        # (H, 4H)
        b    = p_ref[ROW_B:ROW_B + 1, 0:G]            # (1, 4H)  fused b_ih + b_hh
        w_fc = p_ref[ROW_WFC:ROW_WFC + H, 0:O]        # (H, O)
        b_fc = p_ref[ROW_BFC:ROW_BFC + 1, 0:O]        # (1, O)

        # ---- Phase 1: input projection for ALL timesteps, one MXU push.
        #      x is time-major (T*B, I); bias broadcast hoisted out of the loop.
        xg = jnp.dot(x_ref[...], w_ih, preferred_element_type=jnp.float32) + b

        # ---- Phase 2: serial recurrence.  Only h @ W_hh + gate elementwise /
        #      EUP math sits on the dependency chain.  T is tiny & static.
        hs = []
        h = None
        c = None
        for t in range(T):
            gx = xg[t * B:(t + 1) * B, :]              # contiguous (B, 4H) rows
            if t == 0:
                gates = gx                             # h0 == 0 -> skip matmul
            else:
                gates = gx + jnp.dot(h, w_hh,
                                     preferred_element_type=jnp.float32)
            sig = jax.nn.sigmoid(gates[:, 0:3 * H])    # i, f, o in ONE EUP pass
            i_g = sig[:, 0:H]
            f_g = sig[:, H:2 * H]
            o_g = sig[:, 2 * H:3 * H]
            g_g = jnp.tanh(gates[:, 3 * H:4 * H])
            if t == 0:
                c = i_g * g_g                          # c0 == 0 -> drop f*c term
            else:
                c = f_g * c + i_g * g_g
            h = o_g * jnp.tanh(c)
            hs.append(h)                               # stays in vregs

        # ---- Phase 3: deferred FC head over all T*B rows + ONE dense store.
        hs2d = jnp.concatenate(hs, axis=0)             # (T*B, H), time-major
        out_ref[...] = (jnp.dot(hs2d, w_fc, preferred_element_type=jnp.float32)
                        + b_fc).astype(out_ref.dtype)

    return kernel


def meta_ratio_lstm_forward(x, params):
    """Forward pass equivalent to meta_ratio_LSTM.forward (num_layers=1)."""
    w_ih, w_hh, b_ih, b_hh, w_fc, b_fc = params
    x = x.astype(jnp.float32)                                   # (B, T, I)
    B, T, I = x.shape
    H = w_hh.shape[1]
    O = w_fc.shape[0]
    G = 4 * H

    # Gate-column permutation [i, f, g, o] -> [i, f, o, g] so the kernel needs
    # one sigmoid over 0:3H and one tanh over 3H:4H.
    perm = jnp.concatenate([jnp.arange(0, 2 * H),
                            jnp.arange(3 * H, 4 * H),
                            jnp.arange(2 * H, 3 * H)])
    w_ih_t = jnp.transpose(w_ih).astype(jnp.float32)[:, perm]   # (I, 4H)
    w_hh_t = jnp.transpose(w_hh).astype(jnp.float32)[:, perm]   # (H, 4H)
    b_row = (b_ih + b_hh).astype(jnp.float32)[perm].reshape(1, G)
    w_fc_t = jnp.transpose(w_fc).astype(jnp.float32)            # (H, O)
    b_fc_r = b_fc.reshape(1, O).astype(jnp.float32)             # (1, O)

    # Pack everything into ONE padded slab (8-row-aligned sections) -> 2 input
    # DMAs total for the kernel instead of 6.
    ROW_WIH, ROW_WHH, ROW_B, ROW_WFC, ROW_BFC = 0, 16, 32, 40, 56
    NROWS = 64
    WCOLS = max(G, O)
    slab = jnp.zeros((NROWS, WCOLS), jnp.float32)
    slab = slab.at[ROW_WIH:ROW_WIH + I, 0:G].set(w_ih_t)
    slab = slab.at[ROW_WHH:ROW_WHH + H, 0:G].set(w_hh_t)
    slab = slab.at[ROW_B:ROW_B + 1, 0:G].set(b_row)
    slab = slab.at[ROW_WFC:ROW_WFC + H, 0:O].set(w_fc_t)
    slab = slab.at[ROW_BFC:ROW_BFC + 1, 0:O].set(b_fc_r)

    # Time-major flattening: per-step slices inside the kernel are contiguous
    # row blocks (288 floats -> the wrapper transpose is effectively free).
    x_tm = jnp.transpose(x, (1, 0, 2)).reshape(T * B, I)

    kernel = _make_lstm_fc_kernel(
        B, T, I, H, O, (ROW_WIH, ROW_WHH, ROW_B, ROW_WFC, ROW_BFC))

    vmem = lambda: pl.BlockSpec(memory_space=pltpu.MemorySpace.VMEM)
    out2d = pl.pallas_call(
        kernel,
        out_shape=jax.ShapeDtypeStruct((T * B, O), jnp.float32),
        in_specs=[vmem(), vmem()],
        out_specs=vmem(),
    )(x_tm, slab)

    # (T*B, O) -> (B, T, O); tiny (72-float) layout fixup outside the kernel.
    return jnp.transpose(out2d.reshape(T, B, O), (1, 0, 2))


def _reference_forward(x, params):
    """Pure-JAX reference (matches torch.nn.LSTM + nn.Linear semantics)."""
    w_ih, w_hh, b_ih, b_hh, w_fc, b_fc = params
    x = x.astype(jnp.float32)
    B, T, I = x.shape
    H = w_hh.shape[1]

    def step(carry, x_t):
        h, c = carry
        gates = x_t @ w_ih.T + b_ih + h @ w_hh.T + b_hh
        i_g = jax.nn.sigmoid(gates[:, 0 * H:1 * H])
        f_g = jax.nn.sigmoid(gates[:, 1 * H:2 * H])
        g_g = jnp.tanh(gates[:, 2 * H:3 * H])
        o_g = jax.nn.sigmoid(gates[:, 3 * H:4 * H])
        c = f_g * c + i_g * g_g
        h = o_g * jnp.tanh(c)
        return (h, c), h

    h0 = jnp.zeros((B, H), jnp.float32)
    c0 = jnp.zeros((B, H), jnp.float32)
    _, hs = lax.scan(step, (h0, c0), jnp.transpose(x, (1, 0, 2)))
    out = jnp.transpose(hs, (1, 0, 2))                          # (B, T, H)
    return out @ w_fc.T + b_fc


def init_params(key, input_size=9, hidden_size=9, output_size=9):
    """Deterministic parameter init (PyTorch-style U(-1/sqrt(H), 1/sqrt(H)))."""
    ks = jax.random.split(key, 6)
    k = 1.0 / jnp.sqrt(jnp.float32(hidden_size))
    u = lambda kk, shape: jax.random.uniform(kk, shape, jnp.float32, -k, k)
    w_ih = u(ks[0], (4 * hidden_size, input_size))   # gate order: i, f, g, o
    w_hh = u(ks[1], (4 * hidden_size, hidden_size))
    b_ih = u(ks[2], (4 * hidden_size,))
    b_hh = u(ks[3], (4 * hidden_size,))
    w_fc = u(ks[4], (output_size, hidden_size))
    b_fc = u(ks[5], (output_size,))
    return (w_ih, w_hh, b_ih, b_hh, w_fc, b_fc)


if __name__ == "__main__":
    key = jax.random.PRNGKey(0)
    k_par, k_x = jax.random.split(key)

    B, T, I, H, O = 2, 4, 9, 9, 9          # module defaults: seq_len=4, sizes=9
    params = init_params(k_par, I, H, O)
    x = jax.random.normal(k_x, (B, T, I), jnp.float32)

    out = meta_ratio_lstm_forward(x, params)
    out = jax.block_until_ready(out)

    ref = jax.block_until_ready(_reference_forward(x, params))
    assert out.shape == (B, T, O)
    assert bool(jnp.allclose(out, ref, atol=1e-5, rtol=1e-5))

    print("KERNEL_OK")
</pallas_src>

<mosaic_0001>
module attributes {stable_mosaic.version = 11 : i64} {
  func.func @kernel(%arg0: memref<8x9xf32, #tpu.memory_space<vmem>>, %arg1: memref<64x36xf32, #tpu.memory_space<vmem>>, %arg2: memref<8x9xf32, #tpu.memory_space<vmem>>) attributes {dimension_semantics = [], scalar_prefetch = 0 : i64, scratch_operands = 0 : i64, tpu.core_type = #tpu.core_type<tc>} {
    %c0 = arith.constant 0 : index
    %c0_0 = arith.constant 0 : index
    %0 = vector.load %arg1[%c0, %c0_0] : memref<64x36xf32, #tpu.memory_space<vmem>>, vector<9x36xf32>
    %c16 = arith.constant 16 : index
    %c0_1 = arith.constant 0 : index
    %1 = vector.load %arg1[%c16, %c0_1] : memref<64x36xf32, #tpu.memory_space<vmem>>, vector<9x36xf32>
    %c32 = arith.constant 32 : index
    %c0_2 = arith.constant 0 : index
    %2 = vector.load %arg1[%c32, %c0_2] : memref<64x36xf32, #tpu.memory_space<vmem>>, vector<1x36xf32>
    %c40 = arith.constant 40 : index
    %c0_3 = arith.constant 0 : index
    %3 = vector.load %arg1[%c40, %c0_3] : memref<64x36xf32, #tpu.memory_space<vmem>>, vector<9x9xf32>
    %c56 = arith.constant 56 : index
    %c0_4 = arith.constant 0 : index
    %4 = vector.load %arg1[%c56, %c0_4] : memref<64x36xf32, #tpu.memory_space<vmem>>, vector<1x9xf32>
    %c0_5 = arith.constant 0 : index
    %c0_6 = arith.constant 0 : index
    %5 = vector.load %arg0[%c0_5, %c0_6] : memref<8x9xf32, #tpu.memory_space<vmem>>, vector<8x9xf32>
    %cst = arith.constant dense<0.000000e+00> : vector<8x36xf32>
    %6 = tpu.matmul %5, %0, %cst {dimension_numbers = #tpu.dot_dimension_numbers<[1], [0], [0], [1], [0, 0, 1, 1], [], []>} : vector<8x9xf32>, vector<9x36xf32>, vector<8x36xf32> -> vector<8x36xf32>
    %7 = vector.broadcast %2 : vector<1x36xf32> to vector<8x36xf32>
    %8 = arith.addf %6, %7 : vector<8x36xf32>
    %9 = vector.extract_strided_slice %8 {offsets = [0, 0], sizes = [2, 36], strides = [1, 1]} : vector<8x36xf32> to vector<2x36xf32>
    %10 = vector.extract_strided_slice %9 {offsets = [0, 0], sizes = [2, 27], strides = [1, 1]} : vector<2x36xf32> to vector<2x27xf32>
    %11 = arith.negf %10 : vector<2x27xf32>
    %12 = math.exp %11 : vector<2x27xf32>
    %cst_7 = arith.constant 1.000000e+00 : f32
    %13 = vector.broadcast %cst_7 : f32 to vector<2x27xf32>
    %14 = arith.addf %13, %12 : vector<2x27xf32>
    %15 = arith.divf %13, %14 : vector<2x27xf32>
    %16 = vector.extract_strided_slice %15 {offsets = [0, 0], sizes = [2, 9], strides = [1, 1]} : vector<2x27xf32> to vector<2x9xf32>
    %17 = vector.extract_strided_slice %15 {offsets = [0, 18], sizes = [2, 9], strides = [1, 1]} : vector<2x27xf32> to vector<2x9xf32>
    %18 = vector.extract_strided_slice %9 {offsets = [0, 27], sizes = [2, 9], strides = [1, 1]} : vector<2x36xf32> to vector<2x9xf32>
    %19 = math.tanh %18 : vector<2x9xf32>
    %20 = arith.mulf %16, %19 : vector<2x9xf32>
    %21 = math.tanh %20 : vector<2x9xf32>
    %22 = arith.mulf %17, %21 : vector<2x9xf32>
    %23 = vector.extract_strided_slice %8 {offsets = [2, 0], sizes = [2, 36], strides = [1, 1]} : vector<8x36xf32> to vector<2x36xf32>
    %cst_8 = arith.constant dense<0.000000e+00> : vector<2x36xf32>
    %24 = tpu.matmul %22, %1, %cst_8 {dimension_numbers = #tpu.dot_dimension_numbers<[1], [0], [0], [1], [0, 0, 1, 1], [], []>} : vector<2x9xf32>, vector<9x36xf32>, vector<2x36xf32> -> vector<2x36xf32>
    %25 = arith.addf %23, %24 : vector<2x36xf32>
    %26 = vector.extract_strided_slice %25 {offsets = [0, 0], sizes = [2, 27], strides = [1, 1]} : vector<2x36xf32> to vector<2x27xf32>
    %27 = arith.negf %26 : vector<2x27xf32>
    %28 = math.exp %27 : vector<2x27xf32>
    %cst_9 = arith.constant 1.000000e+00 : f32
    %29 = vector.broadcast %cst_9 : f32 to vector<2x27xf32>
    %30 = arith.addf %29, %28 : vector<2x27xf32>
    %31 = arith.divf %29, %30 : vector<2x27xf32>
    %32 = vector.extract_strided_slice %31 {offsets = [0, 0], sizes = [2, 9], strides = [1, 1]} : vector<2x27xf32> to vector<2x9xf32>
    %33 = vector.extract_strided_slice %31 {offsets = [0, 9], sizes = [2, 9], strides = [1, 1]} : vector<2x27xf32> to vector<2x9xf32>
    %34 = vector.extract_strided_slice %31 {offsets = [0, 18], sizes = [2, 9], strides = [1, 1]} : vector<2x27xf32> to vector<2x9xf32>
    %35 = vector.extract_strided_slice %25 {offsets = [0, 27], sizes = [2, 9], strides = [1, 1]} : vector<2x36xf32> to vector<2x9xf32>
    %36 = math.tanh %35 : vector<2x9xf32>
    %37 = arith.mulf %33, %20 : vector<2x9xf32>
    %38 = arith.mulf %32, %36 : vector<2x9xf32>
    %39 = arith.addf %37, %38 : vector<2x9xf32>
    %40 = math.tanh %39 : vector<2x9xf32>
    %41 = arith.mulf %34, %40 : vector<2x9xf32>
    %42 = vector.extract_strided_slice %8 {offsets = [4, 0], sizes = [2, 36], strides = [1, 1]} : vector<8x36xf32> to vector<2x36xf32>
    %cst_10 = arith.constant dense<0.000000e+00> : vector<2x36xf32>
    %43 = tpu.matmul %41, %1, %cst_10 {dimension_numbers = #tpu.dot_dimension_numbers<[1], [0], [0], [1], [0, 0, 1, 1], [], []>} : vector<2x9xf32>, vector<9x36xf32>, vector<2x36xf32> -> vector<2x36xf32>
    %44 = arith.addf %42, %43 : vector<2x36xf32>
    %45 = vector.extract_strided_slice %44 {offsets = [0, 0], sizes = [2, 27], strides = [1, 1]} : vector<2x36xf32> to vector<2x27xf32>
    %46 = arith.negf %45 : vector<2x27xf32>
    %47 = math.exp %46 : vector<2x27xf32>
    %cst_11 = arith.constant 1.000000e+00 : f32
    %48 = vector.broadcast %cst_11 : f32 to vector<2x27xf32>
    %49 = arith.addf %48, %47 : vector<2x27xf32>
    %50 = arith.divf %48, %49 : vector<2x27xf32>
    %51 = vector.extract_strided_slice %50 {offsets = [0, 0], sizes = [2, 9], strides = [1, 1]} : vector<2x27xf32> to vector<2x9xf32>
    %52 = vector.extract_strided_slice %50 {offsets = [0, 9], sizes = [2, 9], strides = [1, 1]} : vector<2x27xf32> to vector<2x9xf32>
    %53 = vector.extract_strided_slice %50 {offsets = [0, 18], sizes = [2, 9], strides = [1, 1]} : vector<2x27xf32> to vector<2x9xf32>
    %54 = vector.extract_strided_slice %44 {offsets = [0, 27], sizes = [2, 9], strides = [1, 1]} : vector<2x36xf32> to vector<2x9xf32>
    %55 = math.tanh %54 : vector<2x9xf32>
    %56 = arith.mulf %52, %39 : vector<2x9xf32>
    %57 = arith.mulf %51, %55 : vector<2x9xf32>
    %58 = arith.addf %56, %57 : vector<2x9xf32>
    %59 = math.tanh %58 : vector<2x9xf32>
    %60 = arith.mulf %53, %59 : vector<2x9xf32>
    %61 = vector.extract_strided_slice %8 {offsets = [6, 0], sizes = [2, 36], strides = [1, 1]} : vector<8x36xf32> to vector<2x36xf32>
    %cst_12 = arith.constant dense<0.000000e+00> : vector<2x36xf32>
    %62 = tpu.matmul %60, %1, %cst_12 {dimension_numbers = #tpu.dot_dimension_numbers<[1], [0], [0], [1], [0, 0, 1, 1], [], []>} : vector<2x9xf32>, vector<9x36xf32>, vector<2x36xf32> -> vector<2x36xf32>
    %63 = arith.addf %61, %62 : vector<2x36xf32>
    %64 = vector.extract_strided_slice %63 {offsets = [0, 0], sizes = [2, 27], strides = [1, 1]} : vector<2x36xf32> to vector<2x27xf32>
    %65 = arith.negf %64 : vector<2x27xf32>
    %66 = math.exp %65 : vector<2x27xf32>
    %cst_13 = arith.constant 1.000000e+00 : f32
    %67 = vector.broadcast %cst_13 : f32 to vector<2x27xf32>
    %68 = arith.addf %67, %66 : vector<2x27xf32>
    %69 = arith.divf %67, %68 : vector<2x27xf32>
    %70 = vector.extract_strided_slice %69 {offsets = [0, 0], sizes = [2, 9], strides = [1, 1]} : vector<2x27xf32> to vector<2x9xf32>
    %71 = vector.extract_strided_slice %69 {offsets = [0, 9], sizes = [2, 9], strides = [1, 1]} : vector<2x27xf32> to vector<2x9xf32>
    %72 = vector.extract_strided_slice %69 {offsets = [0, 18], sizes = [2, 9], strides = [1, 1]} : vector<2x27xf32> to vector<2x9xf32>
    %73 = vector.extract_strided_slice %63 {offsets = [0, 27], sizes = [2, 9], strides = [1, 1]} : vector<2x36xf32> to vector<2x9xf32>
    %74 = math.tanh %73 : vector<2x9xf32>
    %75 = arith.mulf %71, %58 : vector<2x9xf32>
    %76 = arith.mulf %70, %74 : vector<2x9xf32>
    %77 = arith.addf %75, %76 : vector<2x9xf32>
    %78 = math.tanh %77 : vector<2x9xf32>
    %79 = arith.mulf %72, %78 : vector<2x9xf32>
    %80 = tpu.concatenate %22, %41, %60, %79 in 0 : vector<2x9xf32>, vector<2x9xf32>, vector<2x9xf32>, vector<2x9xf32> -> vector<8x9xf32>
    %cst_14 = arith.constant dense<0.000000e+00> : vector<8x9xf32>
    %81 = tpu.matmul %80, %3, %cst_14 {dimension_numbers = #tpu.dot_dimension_numbers<[1], [0], [0], [1], [0, 0, 1, 1], [], []>} : vector<8x9xf32>, vector<9x9xf32>, vector<8x9xf32> -> vector<8x9xf32>
    %82 = vector.broadcast %4 : vector<1x9xf32> to vector<8x9xf32>
    %83 = arith.addf %81, %82 : vector<8x9xf32>
    %c0_15 = arith.constant 0 : index
    %c0_16 = arith.constant 0 : index
    %84 = vector.load %arg2[%c0_15, %c0_16] : memref<8x9xf32, #tpu.memory_space<vmem>>, vector<8x9xf32>
    tpu.vector_store %arg2[%c0_15, %c0_16], %83 {strides = array<i32>} : memref<8x9xf32, #tpu.memory_space<vmem>>, vector<8x9xf32>,
    return
  }
}

</mosaic_0001>

<llo_original>
// kernel: tpu_custom_call.1
$region0: #{tpu_custom_call.1}
  #allocation0 [shape = 'u32[]', space=smem, size = 0x4, offset = 0x4, fixed_abs, tag = 'smem constant byte address 0x4 - core index']
  #allocation1 [shape = 'u32[144,128]{1,0:T(1,128)}', space=vmem, size = 0x12000, scoped, tag = 'internal scratch']
  %s0 = inlined_call_operand.vmem [shape: f32[8,9], index: 0, kind: input, shape index: {}]
  %s1 = inlined_call_operand.vmem [shape: f32[64,36], index: 1, kind: input, shape index: {}]
  %s2 = inlined_call_operand.hbm [shape: f32[8,9], index: 2, kind: output, shape index: {}]
  %s3 = sld [smem:[#allocation0]]
  $region18: #{tpu_custom_call.1} parent=0
    _
  %s5 = ssub.s32 1, %s3
  %s6 = scalar_select 0, %s5, %s3
  $region1: #{tpu_custom_call.1} parent=0
    #allocation2 [shape = 'u8[4096]{0}', space=vmem, size = 0x1000, scoped, tag = 'output window, operand 0, single buffered']
    #allocation3 [shape = 's32[1]{0}', space=sflag, size = 0x4, scoped, tag = 'scoped memory for tpu_custom_call.1']
    %7 = vsyncpa [#allocation3], 0
    // Predicated region
    $region2: #{tpu_custom_call.1} parent=1 // pred_check
      _
    $region3: #{tpu_custom_call.1} parent=1 // pred_check_branch
      %9 = sbr.rel (0) target = $region5
    $region4: #{tpu_custom_call.1} parent=1 // pred_region
      _
    $region5: #{tpu_custom_call.1} parent=1 // pred_fallthru
      _
    // Predicated region
    $region6: #{tpu_custom_call.1} parent=1 // pred_check
      _
    $region7: #{tpu_custom_call.1} parent=1 // pred_check_branch
      %11 = sbr.rel (0) target = $region9
    $region8: #{tpu_custom_call.1} parent=1 // pred_region
      _
    $region9: #{tpu_custom_call.1} parent=1 // pred_fallthru
      _
    %v12 = vld [vmem:[%s1] sm:$0xff]
    %v13 = vld [vmem:[%s1 + $0x8] sm:$0x1]
    %v14 = vld [vmem:[%s1 + $0x10] sm:$0xff]
    %v15 = vld [vmem:[%s1 + $0x18] sm:$0x1]
    %v16 = vld [vmem:[%s1 + $0x20] sm:$0x1]
    %v17 = vld [vmem:[%s1 + $0x28] sm:$0xff]
    %v18 = vld [vmem:[%s1 + $0x30] sm:$0x1]
    %v19 = vld [vmem:[%s1 + $0x38] sm:$0x1]
    %v20 = vld [vmem:[%s0] sm:$0xff]
    %v21 = vlaneseq
    %v22 = vshrl.u32 %v21, 7
    %v23 = vsub.s32 0, %v22
    %v24 = vrot.slane %v16, %v23
    %vm25 = vcmask 72704
    %v27 = vsel %vm25, %v20, 0
    %vm29 = vcmask 1040384
    %v31 = vsel %vm29, %v13, 0
    %33 = vmatprep.subr.mxu0 0.0
    %34 = vmatpush1.msra.mxu0 %v12
    %35 = vmatprep.subr.mxu0 0.0
    %36 = vmatpush1.msra.mxu0 %v31
    %37 = vmatprep.subr.mxu0 0.0
    %38 = vmatpush1.msra.mxu0 0.0
    %39 = vmatprep.subr.mxu0 0.0
    %40 = vmatpush1.msra.mxu0 0.0
    %41 = vmatprep.subr.mxu0 0.0
    %42 = vmatpush1.msra.mxu0 0.0
    %43 = vmatprep.subr.mxu0 0.0
    %44 = vmatpush1.msra.mxu0 0.0
    %45 = vmatprep.subr.mxu0 0.0
    %46 = vmatpush1.msra.mxu0 0.0
    %47 = vmatprep.subr.mxu0 0.0
    %48 = vmatpush1.msra.mxu0 0.0
    %49 = vmatprep.subr.mxu0 0.0
    %50 = vmatpush1.msra.mxu0 0.0
    %51 = vmatprep.subr.mxu0 0.0
    %52 = vmatpush1.msra.mxu0 0.0
    %53 = vmatprep.subr.mxu0 0.0
    %54 = vmatpush1.msra.mxu0 0.0
    %55 = vmatprep.subr.mxu0 0.0
    %56 = vmatpush1.msra.mxu0 0.0
    %57 = vmatprep.subr.mxu0 0.0
    %58 = vmatpush1.msra.mxu0 0.0
    %59 = vmatprep.subr.mxu0 0.0
    %60 = vmatpush1.msra.mxu0 0.0
    %61 = vmatprep.subr.mxu0 0.0
    %62 = vmatpush1.msra.mxu0 0.0
    %63 = vmatprep.subr.mxu0 0.0
    %64 = vmatpush1.msra.mxu0 0.0
    %65 = vmatprep.subr.mxu0 0.0
    %66 = vmatpush1.msra.mxu0 0.0
    %67 = vmatprep.subr.mxu0 0.0
    %68 = vmatpush1.msra.mxu0 0.0
    %69 = vmatprep.subr.mxu0 0.0
    %70 = vmatpush1.msra.mxu0 0.0
    %71 = vmatprep.subr.mxu0 0.0
    %72 = vmatpush1.msra.mxu0 0.0
    %73 = vmatprep.subr.mxu0 0.0
    %74 = vmatpush1.msra.mxu0 0.0
    %75 = vmatprep.subr.mxu0 0.0
    %76 = vmatpush1.msra.mxu0 0.0
    %77 = vmatprep.subr.mxu0 0.0
    %78 = vmatpush1.msra.mxu0 0.0
    %79 = vmatprep.subr.mxu0 0.0
    %80 = vmatpush1.msra.mxu0 0.0
    %81 = vmatprep.subr.mxu0 0.0
    %82 = vmatpush1.msra.mxu0 0.0
    %83 = vmatprep.subr.mxu0 0.0
    %84 = vmatpush1.msra.mxu0 0.0
    %85 = vmatprep.subr.mxu0 0.0
    %86 = vmatpush1.msra.mxu0 0.0
    %87 = vmatprep.subr.mxu0 0.0
    %88 = vmatpush1.msra.mxu0 0.0
    %89 = vmatprep.subr.mxu0 0.0
    %90 = vmatpush1.msra.mxu0 0.0
    %91 = vmatprep.subr.mxu0 0.0
    %92 = vmatpush1.msra.mxu0 0.0
    %93 = vmatprep.subr.mxu0 0.0
    %94 = vmatpush1.msra.mxu0 0.0
    %95 = vmatprep.subr.mxu0 0.0
    %96 = vmatpush1.msra.mxu0 0.0
    %97 = vmatprep.mubr.f32.mxu0 0.0
    %98 = vmatmul.mubr.f32.gmra.mrb[0].mxu0 %v27
    %v99 = vpop.f32.mrb[0].mxu0
    %v100 = vadd.f32 %v24, %v99
    %v101 = vpop.f32.mrb[0].mxu0
    %102 = vdwg.mxu0
    %v103 = vxor.u32 %v100, 2147483648
    %v104 = vmul.f32 %v103, 1.442695
    %v105 = vpow.pop %v104
    %v106 = vadd.f32 %v105, 1.0
    %v107 = vrcp.pop %v106
    %v108 = vmul.f32 1.0, %v107
    %v109 = vtanh.pop %v100
    %111 = vrot.lane.b32.xlu0 %v109, 101
    %v112 = vpop.permute.xlu0 %111
    %v114 = vmul.f32 %v108, %v112
    %v115 = vtanh.pop %v114
    %117 = vrot.lane.b32.xlu0 %v115, 18
    %v118 = vpop.permute.xlu0 %117
    %v120 = vmul.f32 %v108, %v118
    %122 = vrot.lane.b32.xlu0 %v120, 110
    %v123 = vpop.permute.xlu0 %122
    %v124 = vsel %vm25, %v123, 0
    %v127 = vsel %vm29, %v15, 0
    %129 = vmatprep.subr.mxu0 0.0
    %130 = vmatpush1.msra.mxu0 %v14
    %131 = vmatprep.subr.mxu0 0.0
    %132 = vmatpush1.msra.mxu0 %v127
    %133 = vmatprep.subr.mxu0 0.0
    %134 = vmatpush1.msra.mxu0 0.0
    %135 = vmatprep.subr.mxu0 0.0
    %136 = vmatpush1.msra.mxu0 0.0
    %137 = vmatprep.subr.mxu0 0.0
    %138 = vmatpush1.msra.mxu0 0.0
    %139 = vmatprep.subr.mxu0 0.0
    %140 = vmatpush1.msra.mxu0 0.0
    %141 = vmatprep.subr.mxu0 0.0
    %142 = vmatpush1.msra.mxu0 0.0
    %143 = vmatprep.subr.mxu0 0.0
    %144 = vmatpush1.msra.mxu0 0.0
    %145 = vmatprep.subr.mxu0 0.0
    %146 = vmatpush1.msra.mxu0 0.0
    %147 = vmatprep.subr.mxu0 0.0
    %148 = vmatpush1.msra.mxu0 0.0
    %149 = vmatprep.subr.mxu0 0.0
    %150 = vmatpush1.msra.mxu0 0.0
    %151 = vmatprep.subr.mxu0 0.0
    %152 = vmatpush1.msra.mxu0 0.0
    %153 = vmatprep.subr.mxu0 0.0
    %154 = vmatpush1.msra.mxu0 0.0
    %155 = vmatprep.subr.mxu0 0.0
    %156 = vmatpush1.msra.mxu0 0.0
    %157 = vmatprep.subr.mxu0 0.0
    %158 = vmatpush1.msra.mxu0 0.0
    %159 = vmatprep.subr.mxu0 0.0
    %160 = vmatpush1.msra.mxu0 0.0
    %161 = vmatprep.subr.mxu0 0.0
    %162 = vmatpush1.msra.mxu0 0.0
    %163 = vmatprep.subr.mxu0 0.0
    %164 = vmatpush1.msra.mxu0 0.0
    %165 = vmatprep.subr.mxu0 0.0
    %166 = vmatpush1.msra.mxu0 0.0
    %167 = vmatprep.subr.mxu0 0.0
    %168 = vmatpush1.msra.mxu0 0.0
    %169 = vmatprep.subr.mxu0 0.0
    %170 = vmatpush1.msra.mxu0 0.0
    %171 = vmatprep.subr.mxu0 0.0
    %172 = vmatpush1.msra.mxu0 0.0
    %173 = vmatprep.subr.mxu0 0.0
    %174 = vmatpush1.msra.mxu0 0.0
    %175 = vmatprep.subr.mxu0 0.0
    %176 = vmatpush1.msra.mxu0 0.0
    %177 = vmatprep.subr.mxu0 0.0
    %178 = vmatpush1.msra.mxu0 0.0
    %179 = vmatprep.subr.mxu0 0.0
    %180 = vmatpush1.msra.mxu0 0.0
    %181 = vmatprep.subr.mxu0 0.0
    %182 = vmatpush1.msra.mxu0 0.0
    %183 = vmatprep.subr.mxu0 0.0
    %184 = vmatpush1.msra.mxu0 0.0
    %185 = vmatprep.subr.mxu0 0.0
    %186 = vmatpush1.msra.mxu0 0.0
    %187 = vmatprep.subr.mxu0 0.0
    %188 = vmatpush1.msra.mxu0 0.0
    %189 = vmatprep.subr.mxu0 0.0
    %190 = vmatpush1.msra.mxu0 0.0
    %191 = vmatprep.subr.mxu0 0.0
    %192 = vmatpush1.msra.mxu0 0.0
    %193 = vmatprep.mubr.f32.mxu0 0.0
    %194 = vmatmul.mubr.f32.gmra.mrb[0].mxu0 %v124
    %v195 = vpop.f32.mrb[0].mxu0
    %v196 = vadd.f32 0.0, %v195
    %v197 = vpop.f32.mrb[0].mxu0
    %198 = vdwg.mxu0
    %v200 = vrot.slane %v196, 6
    %v202 = vadd.f32 %v100, %v200
    %v203 = vxor.u32 %v202, 2147483648
    %v204 = vmul.f32 %v203, 1.442695
    %v205 = vpow.pop %v204
    %v206 = vadd.f32 %v205, 1.0
    %v207 = vrcp.pop %v206
    %v208 = vmul.f32 1.0, %v207
    %v209 = vtanh.pop %v202
    %v211 = vrot.slane %v114, 6
    %212 = vrot.lane.b32.xlu0 %v211, 9
    %v213 = vpop.permute.xlu0 %212
    %v215 = vmul.f32 %v208, %v213
    %217 = vrot.lane.b32.xlu0 %v209, 101
    %v218 = vpop.permute.xlu0 %217
    %v220 = vmul.f32 %v208, %v218
    %222 = vrot.lane.b32.xlu0 %v220, 9
    %v223 = vpop.permute.xlu0 %222
    %v225 = vadd.f32 %v215, %v223
    %v226 = vtanh.pop %v225
    %228 = vrot.lane.b32.xlu0 %v226, 9
    %v229 = vpop.permute.xlu0 %228
    %v231 = vmul.f32 %v208, %v229
    %v233 = vrot.slane %v231, 2
    %234 = vrot.lane.b32.xlu0 %v233, 110
    %v235 = vpop.permute.xlu0 %234
    %v236 = vsel %vm25, %v235, 0
    %238 = vmatprep.subr.mxu0 0.0
    %239 = vmatpush1.msra.mxu0 %v14
    %240 = vmatprep.subr.mxu0 0.0
    %241 = vmatpush1.msra.mxu0 %v127
    %242 = vmatprep.subr.mxu0 0.0
    %243 = vmatpush1.msra.mxu0 0.0
    %244 = vmatprep.subr.mxu0 0.0
    %245 = vmatpush1.msra.mxu0 0.0
    %246 = vmatprep.subr.mxu0 0.0
    %247 = vmatpush1.msra.mxu0 0.0
    %248 = vmatprep.subr.mxu0 0.0
    %249 = vmatpush1.msra.mxu0 0.0
    %250 = vmatprep.subr.mxu0 0.0
    %251 = vmatpush1.msra.mxu0 0.0
    %252 = vmatprep.subr.mxu0 0.0
    %253 = vmatpush1.msra.mxu0 0.0
    %254 = vmatprep.subr.mxu0 0.0
    %255 = vmatpush1.msra.mxu0 0.0
    %256 = vmatprep.subr.mxu0 0.0
    %257 = vmatpush1.msra.mxu0 0.0
    %258 = vmatprep.subr.mxu0 0.0
    %259 = vmatpush1.msra.mxu0 0.0
    %260 = vmatprep.subr.mxu0 0.0
    %261 = vmatpush1.msra.mxu0 0.0
    %262 = vmatprep.subr.mxu0 0.0
    %263 = vmatpush1.msra.mxu0 0.0
    %264 = vmatprep.subr.mxu0 0.0
    %265 = vmatpush1.msra.mxu0 0.0
    %266 = vmatprep.subr.mxu0 0.0
    %267 = vmatpush1.msra.mxu0 0.0
    %268 = vmatprep.subr.mxu0 0.0
    %269 = vmatpush1.msra.mxu0 0.0
    %270 = vmatprep.subr.mxu0 0.0
    %271 = vmatpush1.msra.mxu0 0.0
    %272 = vmatprep.subr.mxu0 0.0
    %273 = vmatpush1.msra.mxu0 0.0
    %274 = vmatprep.subr.mxu0 0.0
    %275 = vmatpush1.msra.mxu0 0.0
    %276 = vmatprep.subr.mxu0 0.0
    %277 = vmatpush1.msra.mxu0 0.0
    %278 = vmatprep.subr.mxu0 0.0
    %279 = vmatpush1.msra.mxu0 0.0
    %280 = vmatprep.subr.mxu0 0.0
    %281 = vmatpush1.msra.mxu0 0.0
    %282 = vmatprep.subr.mxu0 0.0
    %283 = vmatpush1.msra.mxu0 0.0
    %284 = vmatprep.subr.mxu0 0.0
    %285 = vmatpush1.msra.mxu0 0.0
    %286 = vmatprep.subr.mxu0 0.0
    %287 = vmatpush1.msra.mxu0 0.0
    %288 = vmatprep.subr.mxu0 0.0
    %289 = vmatpush1.msra.mxu0 0.0
    %290 = vmatprep.subr.mxu0 0.0
    %291 = vmatpush1.msra.mxu0 0.0
    %292 = vmatprep.subr.mxu0 0.0
    %293 = vmatpush1.msra.mxu0 0.0
    %294 = vmatprep.subr.mxu0 0.0
    %295 = vmatpush1.msra.mxu0 0.0
    %296 = vmatprep.subr.mxu0 0.0
    %297 = vmatpush1.msra.mxu0 0.0
    %298 = vmatprep.subr.mxu0 0.0
    %299 = vmatpush1.msra.mxu0 0.0
    %300 = vmatprep.subr.mxu0 0.0
    %301 = vmatpush1.msra.mxu0 0.0
    %302 = vmatprep.mubr.f32.mxu0 0.0
    %303 = vmatmul.mubr.f32.gmra.mrb[0].mxu0 %v236
    %v304 = vpop.f32.mrb[0].mxu0
    %v305 = vadd.f32 0.0, %v304
    %v306 = vpop.f32.mrb[0].mxu0
    %307 = vdwg.mxu0
    %v309 = vrot.slane %v305, 4
    %v311 = vadd.f32 %v100, %v309
    %v312 = vxor.u32 %v311, 2147483648
    %v313 = vmul.f32 %v312, 1.442695
    %v314 = vpow.pop %v313
    %v315 = vadd.f32 %v314, 1.0
    %v316 = vrcp.pop %v315
    %v317 = vmul.f32 1.0, %v316
    %v318 = vtanh.pop %v311
    %v320 = vrot.slane %v225, 6
    %v322 = vmul.f32 %v317, %v320
    %324 = vrot.lane.b32.xlu0 %v318, 101
    %v325 = vpop.permute.xlu0 %324
    %v327 = vmul.f32 %v317, %v325
    %329 = vrot.lane.b32.xlu0 %v327, 9
    %v330 = vpop.permute.xlu0 %329
    %v332 = vadd.f32 %v322, %v330
    %v333 = vtanh.pop %v332
    %335 = vrot.lane.b32.xlu0 %v333, 9
    %v336 = vpop.permute.xlu0 %335
    %v338 = vmul.f32 %v317, %v336
    %v340 = vrot.slane %v338, 4
    %341 = vrot.lane.b32.xlu0 %v340, 110
    %v342 = vpop.permute.xlu0 %341
    %v343 = vsel %vm25, %v342, 0
    %345 = vmatprep.subr.mxu0 0.0
    %346 = vmatpush1.msra.mxu0 %v14
    %347 = vmatprep.subr.mxu0 0.0
    %348 = vmatpush1.msra.mxu0 %v127
    %349 = vmatprep.subr.mxu0 0.0
    %350 = vmatpush1.msra.mxu0 0.0
    %351 = vmatprep.subr.mxu0 0.0
    %352 = vmatpush1.msra.mxu0 0.0
    %353 = vmatprep.subr.mxu0 0.0
    %354 = vmatpush1.msra.mxu0 0.0
    %355 = vmatprep.subr.mxu0 0.0
    %356 = vmatpush1.msra.mxu0 0.0
    %357 = vmatprep.subr.mxu0 0.0
    %358 = vmatpush1.msra.mxu0 0.0
    %359 = vmatprep.subr.mxu0 0.0
    %360 = vmatpush1.msra.mxu0 0.0
    %361 = vmatprep.subr.mxu0 0.0
    %362 = vmatpush1.msra.mxu0 0.0
    %363 = vmatprep.subr.mxu0 0.0
    %364 = vmatpush1.msra.mxu0 0.0
    %365 = vmatprep.subr.mxu0 0.0
    %366 = vmatpush1.msra.mxu0 0.0
    %367 = vmatprep.subr.mxu0 0.0
    %368 = vmatpush1.msra.mxu0 0.0
    %369 = vmatprep.subr.mxu0 0.0
    %370 = vmatpush1.msra.mxu0 0.0
    %371 = vmatprep.subr.mxu0 0.0
    %372 = vmatpush1.msra.mxu0 0.0
    %373 = vmatprep.subr.mxu0 0.0
    %374 = vmatpush1.msra.mxu0 0.0
    %375 = vmatprep.subr.mxu0 0.0
    %376 = vmatpush1.msra.mxu0 0.0
    %377 = vmatprep.subr.mxu0 0.0
    %378 = vmatpush1.msra.mxu0 0.0
    %379 = vmatprep.subr.mxu0 0.0
    %380 = vmatpush1.msra.mxu0 0.0
    %381 = vmatprep.subr.mxu0 0.0
    %382 = vmatpush1.msra.mxu0 0.0
    %383 = vmatprep.subr.mxu0 0.0
    %384 = vmatpush1.msra.mxu0 0.0
    %385 = vmatprep.subr.mxu0 0.0
    %386 = vmatpush1.msra.mxu0 0.0
    %387 = vmatprep.subr.mxu0 0.0
    %388 = vmatpush1.msra.mxu0 0.0
    %389 = vmatprep.subr.mxu0 0.0
    %390 = vmatpush1.msra.mxu0 0.0
    %391 = vmatprep.subr.mxu0 0.0
    %392 = vmatpush1.msra.mxu0 0.0
    %393 = vmatprep.subr.mxu0 0.0
    %394 = vmatpush1.msra.mxu0 0.0
    %395 = vmatprep.subr.mxu0 0.0
    %396 = vmatpush1.msra.mxu0 0.0
    %397 = vmatprep.subr.mxu0 0.0
    %398 = vmatpush1.msra.mxu0 0.0
    %399 = vmatprep.subr.mxu0 0.0
    %400 = vmatpush1.msra.mxu0 0.0
    %401 = vmatprep.subr.mxu0 0.0
    %402 = vmatpush1.msra.mxu0 0.0
    %403 = vmatprep.subr.mxu0 0.0
    %404 = vmatpush1.msra.mxu0 0.0
    %405 = vmatprep.subr.mxu0 0.0
    %406 = vmatpush1.msra.mxu0 0.0
    %407 = vmatprep.subr.mxu0 0.0
    %408 = vmatpush1.msra.mxu0 0.0
    %409 = vmatprep.mubr.f32.mxu0 0.0
    %410 = vmatmul.mubr.f32.gmra.mrb[0].mxu0 %v343
    %v411 = vpop.f32.mrb[0].mxu0
    %v412 = vadd.f32 0.0, %v411
    %v413 = vpop.f32.mrb[0].mxu0
    %414 = vdwg.mxu0
    %v416 = vrot.slane %v412, 2
    %v418 = vadd.f32 %v100, %v416
    %v419 = vxor.u32 %v418, 2147483648
    %v420 = vmul.f32 %v419, 1.442695
    %v421 = vpow.pop %v420
    %v422 = vadd.f32 %v421, 1.0
    %v423 = vrcp.pop %v422
    %v424 = vmul.f32 1.0, %v423
    %v425 = vtanh.pop %v418
    %v427 = vrot.slane %v332, 6
    %v429 = vmul.f32 %v424, %v427
    %431 = vrot.lane.b32.xlu0 %v425, 101
    %v432 = vpop.permute.xlu0 %431
    %v434 = vmul.f32 %v424, %v432
    %436 = vrot.lane.b32.xlu0 %v434, 9
    %v437 = vpop.permute.xlu0 %436
    %v439 = vadd.f32 %v429, %v437
    %v440 = vtanh.pop %v439
    %442 = vrot.lane.b32.xlu0 %v440, 9
    %v443 = vpop.permute.xlu0 %442
    %v445 = vmul.f32 %v424, %v443
    %vm446 = vcmask 1041408
    %v447 = vsel %vm446, %v120, %v231
    %vm448 = vcmask 1043456
    %v449 = vsel %vm448, %v447, %v338
    %vm450 = vcmask 1045504
    %v451 = vsel %vm450, %v449, %v445
    %v452 = vlaneseq
    %v453 = vshrl.u32 %v452, 7
    %v454 = vsub.s32 0, %v453
    %v455 = vrot.slane %v19, %v454
    %457 = vrot.lane.b32.xlu0 %v451, 110
    %v458 = vpop.permute.xlu0 %457
    %v459 = vsel %vm25, %v458, 0
    %v462 = vsel %vm29, %v18, 0
    %464 = vmatprep.subr.mxu0 0.0
    %465 = vmatpush1.msra.mxu0 %v17
    %466 = vmatprep.subr.mxu0 0.0
    %467 = vmatpush1.msra.mxu0 %v462
    %468 = vmatprep.subr.mxu0 0.0
    %469 = vmatpush1.msra.mxu0 0.0
    %470 = vmatprep.subr.mxu0 0.0
    %471 = vmatpush1.msra.mxu0 0.0
    %472 = vmatprep.subr.mxu0 0.0
    %473 = vmatpush1.msra.mxu0 0.0
    %474 = vmatprep.subr.mxu0 0.0
    %475 = vmatpush1.msra.mxu0 0.0
    %476 = vmatprep.subr.mxu0 0.0
    %477 = vmatpush1.msra.mxu0 0.0
    %478 = vmatprep.subr.mxu0 0.0
    %479 = vmatpush1.msra.mxu0 0.0
    %480 = vmatprep.subr.mxu0 0.0
    %481 = vmatpush1.msra.mxu0 0.0
    %482 = vmatprep.subr.mxu0 0.0
    %483 = vmatpush1.msra.mxu0 0.0
    %484 = vmatprep.subr.mxu0 0.0
    %485 = vmatpush1.msra.mxu0 0.0
    %486 = vmatprep.subr.mxu0 0.0
    %487 = vmatpush1.msra.mxu0 0.0
    %488 = vmatprep.subr.mxu0 0.0
    %489 = vmatpush1.msra.mxu0 0.0
    %490 = vmatprep.subr.mxu0 0.0
    %491 = vmatpush1.msra.mxu0 0.0
    %492 = vmatprep.subr.mxu0 0.0
    %493 = vmatpush1.msra.mxu0 0.0
    %494 = vmatprep.subr.mxu0 0.0
    %495 = vmatpush1.msra.mxu0 0.0
    %496 = vmatprep.subr.mxu0 0.0
    %497 = vmatpush1.msra.mxu0 0.0
    %498 = vmatprep.subr.mxu0 0.0
    %499 = vmatpush1.msra.mxu0 0.0
    %500 = vmatprep.subr.mxu0 0.0
    %501 = vmatpush1.msra.mxu0 0.0
    %502 = vmatprep.subr.mxu0 0.0
    %503 = vmatpush1.msra.mxu0 0.0
    %504 = vmatprep.subr.mxu0 0.0
    %505 = vmatpush1.msra.mxu0 0.0
    %506 = vmatprep.subr.mxu0 0.0
    %507 = vmatpush1.msra.mxu0 0.0
    %508 = vmatprep.subr.mxu0 0.0
    %509 = vmatpush1.msra.mxu0 0.0
    %510 = vmatprep.subr.mxu0 0.0
    %511 = vmatpush1.msra.mxu0 0.0
    %512 = vmatprep.subr.mxu0 0.0
    %513 = vmatpush1.msra.mxu0 0.0
    %514 = vmatprep.subr.mxu0 0.0
    %515 = vmatpush1.msra.mxu0 0.0
    %516 = vmatprep.subr.mxu0 0.0
    %517 = vmatpush1.msra.mxu0 0.0
    %518 = vmatprep.subr.mxu0 0.0
    %519 = vmatpush1.msra.mxu0 0.0
    %520 = vmatprep.subr.mxu0 0.0
    %521 = vmatpush1.msra.mxu0 0.0
    %522 = vmatprep.subr.mxu0 0.0
    %523 = vmatpush1.msra.mxu0 0.0
    %524 = vmatprep.subr.mxu0 0.0
    %525 = vmatpush1.msra.mxu0 0.0
    %526 = vmatprep.subr.mxu0 0.0
    %527 = vmatpush1.msra.mxu0 0.0
    %528 = vmatprep.mubr.f32.mxu0 0.0
    %529 = vmatmul.mubr.f32.gmra.mrb[0].mxu0 %v459
    %v530 = vpop.f32.mrb[0].mxu0
    %v531 = vadd.f32 %v455, %v530
    %v532 = vpop.f32.mrb[0].mxu0
    %533 = vdwg.mxu0
    %534 = vst.msk [vmem:[#allocation2] sm:$0xff] %vm25, %v531
    // Predicated region
    $region10: #{tpu_custom_call.1} parent=1 // pred_check
      _
    $region11: #{tpu_custom_call.1} parent=1 // pred_check_branch
      %536 = sbr.rel (0) target = $region13
    $region12: #{tpu_custom_call.1} parent=1 // pred_region
      %s538 = ssub.s32 128, 128
      %539 = vsyncadd [#allocation3], %s538
      %s541 = sshll.u32 [#allocation2], 4
      %s542 = int_to_ptr.vmem [resolvable:$true] %s541
      %544 = dma.vmem_to_hbm [thread:$0]  %s542, 128, %s2, [#allocation3]
    $region13: #{tpu_custom_call.1} parent=1 // pred_fallthru
      _
    // Predicated region
    $region14: #{tpu_custom_call.1} parent=1 // pred_check
      _
    $region15: #{tpu_custom_call.1} parent=1 // pred_check_branch
      %546 = sbr.rel (0) target = $region17
    $region16: #{tpu_custom_call.1} parent=1 // pred_region
      %547 = dma.done [#allocation3], 128
    $region17: #{tpu_custom_call.1} parent=1 // pred_fallthru
      _
    %548 = vsyncpa [#allocation3], 1

</llo_original>
